<compile_context>
chip_gen: v6e
topology: v6e:2x2x1
jax: 0.10.0
libtpu: 0.0.40
codegen_flags: <defaults>
</compile_context>

<pallas_src>
import functools

import jax
import jax.numpy as jnp
from jax import lax
from jax.experimental import pallas as pl
from jax.experimental.pallas import tpu as pltpu

BN_EPS = 1e-5
LANE = 128


# ---------------------------------------------------------------------------
# Kernel
# ---------------------------------------------------------------------------
def mlp_kernel(x_ref, w1_ref, b1_ref, w2_ref, b2_ref, w3_ref, b3_ref, o_ref):
    # x arrives as f32; cast to bf16 in-kernel (free under MXU/DMA slack).
    x = x_ref[...].astype(jnp.bfloat16)

    # fc1 (BN folded) + relu ; dropout1 = identity at inference
    h = jnp.dot(x, w1_ref[...], preferred_element_type=jnp.float32) + b1_ref[...]
    h = jnp.maximum(h, 0.0).astype(jnp.bfloat16)

    # fc2 (BN folded) + relu ; dropout2 = identity at inference
    h = jnp.dot(h, w2_ref[...], preferred_element_type=jnp.float32) + b2_ref[...]
    h = jnp.maximum(h, 0.0).astype(jnp.bfloat16)

    # fc3 (output padded to 128 lanes -> lane-dense store)
    o_ref[...] = jnp.dot(h, w3_ref[...],
                         preferred_element_type=jnp.float32) + b3_ref[...]


# ---------------------------------------------------------------------------
# Host-side parameter preparation
# ---------------------------------------------------------------------------
def fold_bn(w, b, gamma, beta, mean, var, eps=BN_EPS):
    """Fold an inference-mode BatchNorm1d into the preceding Linear (f32)."""
    scale = gamma * lax.rsqrt(var + eps)          # (1, N)
    w_f = w * scale                               # (K, N) * (1, N)
    b_f = (b - mean) * scale + beta               # (1, N)
    return w_f, b_f


def fold_params(params):
    """BN folding (f32), bf16 weight cast, fc3 lane padding.

    Returns (folded_arrays_dict, num_classes).  The dict contains arrays only,
    so it can be passed straight into the jitted forward.
    """
    w1, b1 = fold_bn(params["w1"], params["b1"], params["g1"], params["be1"],
                     params["m1"], params["v1"])
    w2, b2 = fold_bn(params["w2"], params["b2"], params["g2"], params["be2"],
                     params["m2"], params["v2"])
    w3, b3 = params["w3"], params["b3"]

    h2, nc = w3.shape
    nc_pad = max(LANE, ((nc + LANE - 1) // LANE) * LANE)
    w3p = jnp.zeros((h2, nc_pad), jnp.float32).at[:, :nc].set(w3)
    b3p = jnp.zeros((1, nc_pad), jnp.float32).at[:, :nc].set(b3)

    folded = dict(
        w1=w1.astype(jnp.bfloat16), b1=b1.astype(jnp.float32),
        w2=w2.astype(jnp.bfloat16), b2=b2.astype(jnp.float32),
        w3=w3p.astype(jnp.bfloat16), b3=b3p.astype(jnp.float32),
    )
    return folded, nc


def _round_up(x, m):
    return ((x + m - 1) // m) * m


def _pick_tile(batch):
    """Adaptive batch tile.

    Small batches: a single round_up(B, 16) tile (no padding to 128 rows).
    Large batches: 256/512-row tiles (multiple of 256 for the v6e/v7x MXU),
    always producing >= 2 tiles so v7x megacore has work on both cores.
    """
    if batch <= 256:
        return max(16, _round_up(batch, 16))
    for tb in (512, 256):
        if pl.cdiv(batch, tb) >= 2:
            return tb
    return 256


# ---------------------------------------------------------------------------
# Forward
# ---------------------------------------------------------------------------
@functools.partial(jax.jit, static_argnames=("tb", "num_classes"))
def _forward_jit(x, folded, *, tb, num_classes):
    B, D = x.shape
    w1, b1 = folded["w1"], folded["b1"]
    w2, b2 = folded["w2"], folded["b2"]
    w3, b3 = folded["w3"], folded["b3"]
    H1 = w1.shape[1]
    H2 = w2.shape[1]
    NCP = w3.shape[1]

    n_tiles = pl.cdiv(B, tb)
    B_pad = n_tiles * tb
    if B_pad != B:
        x = jnp.pad(x, ((0, B_pad - B), (0, 0)))

    flops = 2 * B_pad * (D * H1 + H1 * H2 + H2 * NCP)
    bytes_accessed = (
        B_pad * D * 4                      # x (f32)
        + (D * H1 + H1 * H2 + H2 * NCP) * 2  # bf16 weights
        + (H1 + H2 + NCP) * 4                # f32 biases
        + B_pad * NCP * 4                    # f32 output
    )

    grid_spec = pltpu.PrefetchScalarGridSpec(
        num_scalar_prefetch=0,
        grid=(n_tiles,),
        in_specs=[
            pl.BlockSpec((tb, D), lambda i: (i, 0)),     # x tile (pipelined, f32)
            pl.BlockSpec((D, H1), lambda i: (0, 0)),     # w1 (VMEM-resident)
            pl.BlockSpec((1, H1), lambda i: (0, 0)),     # b1
            pl.BlockSpec((H1, H2), lambda i: (0, 0)),    # w2
            pl.BlockSpec((1, H2), lambda i: (0, 0)),     # b2
            pl.BlockSpec((H2, NCP), lambda i: (0, 0)),   # w3 (lane-padded)
            pl.BlockSpec((1, NCP), lambda i: (0, 0)),    # b3
        ],
        out_specs=pl.BlockSpec((tb, NCP), lambda i: (i, 0)),
    )

    out = pl.pallas_call(
        mlp_kernel,
        out_shape=jax.ShapeDtypeStruct((B_pad, NCP), jnp.float32),
        grid_spec=grid_spec,
        compiler_params=pltpu.CompilerParams(
            dimension_semantics=("parallel",),   # megacore split on v7x
            vmem_limit_bytes=32 << 20,           # safe on v5e/v6e/v7x
        ),
        cost_estimate=pl.CostEstimate(
            flops=flops, transcendentals=0, bytes_accessed=bytes_accessed),
    )(x, w1, b1, w2, b2, w3, b3)

    # num_classes / B are static here -> plain static slice.
    return out[:B, :num_classes]


def neural_net_forward(x, folded, num_classes, *, tb=None):
    """x: [B, D] f32 -> logits [B, num_classes] f32."""
    if tb is None:
        tb = _pick_tile(x.shape[0])
    return _forward_jit(x, folded, tb=tb, num_classes=num_classes)


# ---------------------------------------------------------------------------
# Parameter init + references
# ---------------------------------------------------------------------------
def init_params(key, input_size, num_classes):
    ks = jax.random.split(key, 8)
    h1, h2 = 512, 256

    def linear(k, fan_in, fan_out):
        bound = 1.0 / jnp.sqrt(fan_in)
        kw, kb = jax.random.split(k)
        w = jax.random.uniform(kw, (fan_in, fan_out), jnp.float32, -bound, bound)
        b = jax.random.uniform(kb, (1, fan_out), jnp.float32, -bound, bound)
        return w, b

    w1, b1 = linear(ks[0], input_size, h1)
    w2, b2 = linear(ks[1], h1, h2)
    w3, b3 = linear(ks[2], h2, num_classes)

    g1 = jnp.ones((1, h1), jnp.float32)
    be1 = jnp.zeros((1, h1), jnp.float32)
    m1 = 0.1 * jax.random.normal(ks[3], (1, h1), jnp.float32)
    v1 = 1.0 + 0.05 * jax.random.uniform(ks[4], (1, h1), jnp.float32)

    g2 = jnp.ones((1, h2), jnp.float32)
    be2 = jnp.zeros((1, h2), jnp.float32)
    m2 = 0.1 * jax.random.normal(ks[5], (1, h2), jnp.float32)
    v2 = 1.0 + 0.05 * jax.random.uniform(ks[6], (1, h2), jnp.float32)

    return dict(w1=w1, b1=b1, g1=g1, be1=be1, m1=m1, v1=v1,
                w2=w2, b2=b2, g2=g2, be2=be2, m2=m2, v2=v2,
                w3=w3, b3=b3)


def reference_forward_f32(x, p):
    """Original-module semantics, full f32 (BN not folded)."""
    h = x @ p["w1"] + p["b1"]
    h = (h - p["m1"]) * lax.rsqrt(p["v1"] + BN_EPS) * p["g1"] + p["be1"]
    h = jnp.maximum(h, 0.0)
    h = h @ p["w2"] + p["b2"]
    h = (h - p["m2"]) * lax.rsqrt(p["v2"] + BN_EPS) * p["g2"] + p["be2"]
    h = jnp.maximum(h, 0.0)
    return h @ p["w3"] + p["b3"]


def reference_forward_bf16(x, folded, num_classes):
    """Same numerics path as the kernel (folded bf16 weights, f32 accum)."""
    h = jnp.dot(x.astype(jnp.bfloat16), folded["w1"],
                preferred_element_type=jnp.float32) + folded["b1"]
    h = jnp.maximum(h, 0.0).astype(jnp.bfloat16)
    h = jnp.dot(h, folded["w2"],
                preferred_element_type=jnp.float32) + folded["b2"]
    h = jnp.maximum(h, 0.0).astype(jnp.bfloat16)
    out = jnp.dot(h, folded["w3"],
                  preferred_element_type=jnp.float32) + folded["b3"]
    return out[:, :num_classes]


if __name__ == "__main__":
    key = jax.random.PRNGKey(0)
    k_x, k_p = jax.random.split(key)

    batch = 8
    input_size = 64      # stands in for the densenet121 feature dim
    num_classes = 4

    x = jax.random.normal(k_x, (batch, input_size), jnp.float32)
    params = init_params(k_p, input_size, num_classes)
    folded, nc = fold_params(params)

    out = neural_net_forward(x, folded, nc)
    out = jax.block_until_ready(out)
    assert out.shape == (batch, num_classes)

    # Exact-path check (same folded bf16 weights, plain-JAX matmuls).
    ref_bf16 = reference_forward_bf16(x, folded, nc)
    assert jnp.allclose(out, ref_bf16, atol=2e-3, rtol=2e-3), \
        "mismatch vs folded-bf16 reference"

    # Fidelity check vs original f32 BatchNorm module semantics.
    ref_f32 = reference_forward_f32(x, params)
    assert jnp.allclose(out, ref_f32, atol=3e-2, rtol=3e-2), \
        "mismatch vs f32 module reference"

    # Also exercise a larger, multi-tile batch (2 tiles -> v7x megacore path).
    big_b = 520
    xb = jax.random.normal(k_x, (big_b, input_size), jnp.float32)
    out_big = jax.block_until_ready(neural_net_forward(xb, folded, nc))
    assert out_big.shape == (big_b, num_classes)
    ref_big = reference_forward_bf16(xb, folded, nc)
    assert jnp.allclose(out_big, ref_big, atol=2e-3, rtol=2e-3), \
        "mismatch vs folded-bf16 reference (large batch)"

    print("KERNEL_OK")
</pallas_src>

<mosaic_0001>
module attributes {stable_mosaic.version = 11 : i64} {
  func.func @mlp_kernel(%arg0: i32, %arg1: memref<16x64xf32, #tpu.memory_space<vmem>>, %arg2: memref<64x512xbf16, #tpu.memory_space<vmem>>, %arg3: memref<1x512xf32, #tpu.memory_space<vmem>>, %arg4: memref<512x256xbf16, #tpu.memory_space<vmem>>, %arg5: memref<1x256xf32, #tpu.memory_space<vmem>>, %arg6: memref<256x128xbf16, #tpu.memory_space<vmem>>, %arg7: memref<1x128xf32, #tpu.memory_space<vmem>>, %arg8: memref<16x128xf32, #tpu.memory_space<vmem>>) attributes {dimension_semantics = [#tpu.dimension_semantics<parallel>], iteration_bounds = array<i64: 1>, scalar_prefetch = 0 : i64, scratch_operands = 0 : i64, tpu.core_type = #tpu.core_type<tc>, window_params = [{transform_indices = @transform_0, window_bounds = array<i64: 16, 64>}, {pipeline_mode = #tpu.pipeline_mode<synchronous>, transform_indices = @transform_1, window_bounds = array<i64: 64, 512>}, {pipeline_mode = #tpu.pipeline_mode<synchronous>, transform_indices = @transform_2, window_bounds = array<i64: 1, 512>}, {pipeline_mode = #tpu.pipeline_mode<synchronous>, transform_indices = @transform_3, window_bounds = array<i64: 512, 256>}, {pipeline_mode = #tpu.pipeline_mode<synchronous>, transform_indices = @transform_4, window_bounds = array<i64: 1, 256>}, {pipeline_mode = #tpu.pipeline_mode<synchronous>, transform_indices = @transform_5, window_bounds = array<i64: 256, 128>}, {pipeline_mode = #tpu.pipeline_mode<synchronous>, transform_indices = @transform_6, window_bounds = array<i64: 1, 128>}, {transform_indices = @transform_7, window_bounds = array<i64: 16, 128>}]} {
    %c0 = arith.constant 0 : index
    %c0_0 = arith.constant 0 : index
    %0 = vector.load %arg1[%c0, %c0_0] : memref<16x64xf32, #tpu.memory_space<vmem>>, vector<16x64xf32>
    %1 = arith.truncf %0 : vector<16x64xf32> to vector<16x64xbf16>
    %c0_1 = arith.constant 0 : index
    %c0_2 = arith.constant 0 : index
    %2 = vector.load %arg2[%c0_1, %c0_2] : memref<64x512xbf16, #tpu.memory_space<vmem>>, vector<64x512xbf16>
    %cst = arith.constant dense<0.000000e+00> : vector<16x512xf32>
    %3 = tpu.matmul %1, %2, %cst {dimension_numbers = #tpu.dot_dimension_numbers<[1], [0], [0], [1], [0, 0, 1, 1], [], []>} : vector<16x64xbf16>, vector<64x512xbf16>, vector<16x512xf32> -> vector<16x512xf32>
    %c0_3 = arith.constant 0 : index
    %c0_4 = arith.constant 0 : index
    %4 = vector.load %arg3[%c0_3, %c0_4] : memref<1x512xf32, #tpu.memory_space<vmem>>, vector<1x512xf32>
    %5 = vector.broadcast %4 : vector<1x512xf32> to vector<16x512xf32>
    %6 = arith.addf %3, %5 : vector<16x512xf32>
    %cst_5 = arith.constant 0.000000e+00 : f32
    %7 = vector.broadcast %cst_5 : f32 to vector<16x512xf32>
    %8 = arith.maximumf %6, %7 : vector<16x512xf32>
    %9 = arith.truncf %8 : vector<16x512xf32> to vector<16x512xbf16>
    %c0_6 = arith.constant 0 : index
    %c0_7 = arith.constant 0 : index
    %10 = vector.load %arg4[%c0_6, %c0_7] : memref<512x256xbf16, #tpu.memory_space<vmem>>, vector<512x256xbf16>
    %cst_8 = arith.constant dense<0.000000e+00> : vector<16x256xf32>
    %11 = tpu.matmul %9, %10, %cst_8 {dimension_numbers = #tpu.dot_dimension_numbers<[1], [0], [0], [1], [0, 0, 1, 1], [], []>} : vector<16x512xbf16>, vector<512x256xbf16>, vector<16x256xf32> -> vector<16x256xf32>
    %c0_9 = arith.constant 0 : index
    %c0_10 = arith.constant 0 : index
    %12 = vector.load %arg5[%c0_9, %c0_10] : memref<1x256xf32, #tpu.memory_space<vmem>>, vector<1x256xf32>
    %13 = vector.broadcast %12 : vector<1x256xf32> to vector<16x256xf32>
    %14 = arith.addf %11, %13 : vector<16x256xf32>
    %cst_11 = arith.constant 0.000000e+00 : f32
    %15 = vector.broadcast %cst_11 : f32 to vector<16x256xf32>
    %16 = arith.maximumf %14, %15 : vector<16x256xf32>
    %17 = arith.truncf %16 : vector<16x256xf32> to vector<16x256xbf16>
    %c0_12 = arith.constant 0 : index
    %c0_13 = arith.constant 0 : index
    %18 = vector.load %arg6[%c0_12, %c0_13] : memref<256x128xbf16, #tpu.memory_space<vmem>>, vector<256x128xbf16>
    %cst_14 = arith.constant dense<0.000000e+00> : vector<16x128xf32>
    %19 = tpu.matmul %17, %18, %cst_14 {dimension_numbers = #tpu.dot_dimension_numbers<[1], [0], [0], [1], [0, 0, 1, 1], [], []>} : vector<16x256xbf16>, vector<256x128xbf16>, vector<16x128xf32> -> vector<16x128xf32>
    %c0_15 = arith.constant 0 : index
    %c0_16 = arith.constant 0 : index
    %20 = vector.load %arg7[%c0_15, %c0_16] : memref<1x128xf32, #tpu.memory_space<vmem>>, vector<1x128xf32>
    %21 = vector.broadcast %20 : vector<1x128xf32> to vector<16x128xf32>
    %22 = arith.addf %19, %21 : vector<16x128xf32>
    %c0_17 = arith.constant 0 : index
    %c0_18 = arith.constant 0 : index
    %23 = vector.load %arg8[%c0_17, %c0_18] : memref<16x128xf32, #tpu.memory_space<vmem>>, vector<16x128xf32>
    tpu.vector_store %arg8[%c0_17, %c0_18], %22 {strides = array<i32>} : memref<16x128xf32, #tpu.memory_space<vmem>>, vector<16x128xf32>,
    return
  }
  func.func @transform_0(%arg0: i32) -> (i32, i32) {
    %c0_i32 = arith.constant 0 : i32
    %c0_i32_0 = arith.constant 0 : i32
    return %arg0, %c0_i32 : i32, i32
  }
  func.func @transform_1(%arg0: i32) -> (i32, i32) {
    %c0_i32 = arith.constant 0 : i32
    %c0_i32_0 = arith.constant 0 : i32
    %c0_i32_1 = arith.constant 0 : i32
    return %c0_i32, %c0_i32_0 : i32, i32
  }
  func.func @transform_2(%arg0: i32) -> (i32, i32) {
    %c0_i32 = arith.constant 0 : i32
    %c0_i32_0 = arith.constant 0 : i32
    %c0_i32_1 = arith.constant 0 : i32
    return %c0_i32, %c0_i32_0 : i32, i32
  }
  func.func @transform_3(%arg0: i32) -> (i32, i32) {
    %c0_i32 = arith.constant 0 : i32
    %c0_i32_0 = arith.constant 0 : i32
    %c0_i32_1 = arith.constant 0 : i32
    return %c0_i32, %c0_i32_0 : i32, i32
  }
  func.func @transform_4(%arg0: i32) -> (i32, i32) {
    %c0_i32 = arith.constant 0 : i32
    %c0_i32_0 = arith.constant 0 : i32
    %c0_i32_1 = arith.constant 0 : i32
    return %c0_i32, %c0_i32_0 : i32, i32
  }
  func.func @transform_5(%arg0: i32) -> (i32, i32) {
    %c0_i32 = arith.constant 0 : i32
    %c0_i32_0 = arith.constant 0 : i32
    %c0_i32_1 = arith.constant 0 : i32
    return %c0_i32, %c0_i32_0 : i32, i32
  }
  func.func @transform_6(%arg0: i32) -> (i32, i32) {
    %c0_i32 = arith.constant 0 : i32
    %c0_i32_0 = arith.constant 0 : i32
    %c0_i32_1 = arith.constant 0 : i32
    return %c0_i32, %c0_i32_0 : i32, i32
  }
  func.func @transform_7(%arg0: i32) -> (i32, i32) {
    %c0_i32 = arith.constant 0 : i32
    %c0_i32_0 = arith.constant 0 : i32
    return %arg0, %c0_i32 : i32, i32
  }
}

</mosaic_0001>

<llo_original>
// kernel: _forward_jit.1
$region0: #{_forward_jit.1}
  #allocation0 [shape = 'u32[]', space=smem, size = 0x4, offset = 0x4, fixed_abs, tag = 'smem constant byte address 0x4 - core index']
  #allocation1 [shape = 'u32[144,128]{1,0:T(1,128)}', space=vmem, size = 0x12000, scoped, tag = 'internal scratch']
  %s0 = inlined_call_operand.vmem [shape: f32[16,64], index: 0, kind: input, shape index: {}]
  %s1 = inlined_call_operand.hbm [shape: bf16[64,512], index: 1, kind: input, shape index: {}]
  %s2 = inlined_call_operand.vmem [shape: f32[1,512], index: 2, kind: input, shape index: {}]
  %s3 = inlined_call_operand.hbm [shape: bf16[512,256], index: 3, kind: input, shape index: {}]
  %s4 = inlined_call_operand.vmem [shape: f32[1,256], index: 4, kind: input, shape index: {}]
  %s5 = inlined_call_operand.hbm [shape: bf16[256,128], index: 5, kind: input, shape index: {}]
  %s6 = inlined_call_operand.vmem [shape: f32[1,128], index: 6, kind: input, shape index: {}]
  %s7 = inlined_call_operand.vmem [shape: f32[16,128], index: 7, kind: output, shape index: {}]
  %s8 = sld [smem:[#allocation0]]
  $region50: #{_forward_jit.1} parent=0
    _
  %s10 = ssub.s32 1, %s8
  %s11 = scalar_select 0, %s10, %s8
  $region1: #{_forward_jit.1} parent=0
    #allocation2 [shape = 'u8[65536]{0}', space=vmem, size = 0x10000, scoped, tag = 'input window, operand 1, single buffered']
    #allocation3 [shape = 's32[1]{0}', space=sflag, size = 0x4, scoped, tag = 'scoped memory for _forward_jit.1']
    #allocation4 [shape = 'u8[262144]{0}', space=vmem, size = 0x40000, scoped, tag = 'input window, operand 3, single buffered']
    #allocation5 [shape = 's32[1]{0}', space=sflag, size = 0x4, scoped, tag = 'scoped memory for _forward_jit.1']
    #allocation6 [shape = 'u8[65536]{0}', space=vmem, size = 0x10000, scoped, tag = 'input window, operand 5, single buffered']
    %12 = vsyncpa [#allocation3], 0
    %13 = vsyncpa [#allocation5], 0
    // Predicated region
    $region2: #{_forward_jit.1} parent=1 // pred_check
      _
    $region3: #{_forward_jit.1} parent=1 // pred_check_branch
      %15 = sbr.rel (0) target = $region5
    $region4: #{_forward_jit.1} parent=1 // pred_region
      _
    $region5: #{_forward_jit.1} parent=1 // pred_fallthru
      _
    // Predicated region
    $region6: #{_forward_jit.1} parent=1 // pred_check
      _
    $region7: #{_forward_jit.1} parent=1 // pred_check_branch
      %17 = sbr.rel (0) target = $region9
    $region8: #{_forward_jit.1} parent=1 // pred_region
      %s19 = ssub.s32 2048, 2048
      %20 = vsyncadd [#allocation3], %s19
      %s21 = sshll.u32 [#allocation2], 4
      %s22 = int_to_ptr.vmem [resolvable:$true] %s21
      %27 = dma.hbm_to_vmem [thread:$0]  %s1, 2048, %s22, [#allocation3], 256, 256, 16
    $region9: #{_forward_jit.1} parent=1 // pred_fallthru
      _
    // Predicated region
    $region10: #{_forward_jit.1} parent=1 // pred_check
      _
    $region11: #{_forward_jit.1} parent=1 // pred_check_branch
      %29 = sbr.rel (0) target = $region13
    $region12: #{_forward_jit.1} parent=1 // pred_region
      _
    $region13: #{_forward_jit.1} parent=1 // pred_fallthru
      _
    // Predicated region
    $region14: #{_forward_jit.1} parent=1 // pred_check
      _
    $region15: #{_forward_jit.1} parent=1 // pred_check_branch
      %31 = sbr.rel (0) target = $region17
    $region16: #{_forward_jit.1} parent=1 // pred_region
      %s33 = ssub.s32 8192, 8192
      %34 = vsyncadd [#allocation5], %s33
      %s35 = sshll.u32 [#allocation4], 4
      %s36 = int_to_ptr.vmem [resolvable:$true] %s35
      %41 = dma.hbm_to_vmem [thread:$0]  %s3, 8192, %s36, [#allocation5], 128, 128, 8
    $region17: #{_forward_jit.1} parent=1 // pred_fallthru
      _
    // Predicated region
    $region18: #{_forward_jit.1} parent=1 // pred_check
      _
    $region19: #{_forward_jit.1} parent=1 // pred_check_branch
      %43 = sbr.rel (0) target = $region21
    $region20: #{_forward_jit.1} parent=1 // pred_region
      _
    $region21: #{_forward_jit.1} parent=1 // pred_fallthru
      _
    // Predicated region
    $region22: #{_forward_jit.1} parent=1 // pred_check
      _
    $region23: #{_forward_jit.1} parent=1 // pred_check_branch
      %45 = sbr.rel (0) target = $region25
    $region24: #{_forward_jit.1} parent=1 // pred_region
      %s47 = ssub.s32 2048, 2048
      %48 = vsyncadd [#allocation5], %s47
      %s49 = sshll.u32 [#allocation6], 4
      %s50 = int_to_ptr.vmem [resolvable:$true] %s49
      %55 = dma.hbm_to_vmem [thread:$0]  %s5, 2048, %s50, [#allocation5], 64, 64, 4
    $region25: #{_forward_jit.1} parent=1 // pred_fallthru
      _
    // Predicated region
    $region26: #{_forward_jit.1} parent=1 // pred_check
      _
    $region27: #{_forward_jit.1} parent=1 // pred_check_branch
      %57 = sbr.rel (0) target = $region29
    $region28: #{_forward_jit.1} parent=1 // pred_region
      _
    $region29: #{_forward_jit.1} parent=1 // pred_fallthru
      _
    // Predicated region
    $region30: #{_forward_jit.1} parent=1 // pred_check
      _
    $region31: #{_forward_jit.1} parent=1 // pred_check_branch
      %59 = sbr.rel (0) target = $region33
    $region32: #{_forward_jit.1} parent=1 // pred_region
      %60 = dma.done [#allocation3], 2048
    $region33: #{_forward_jit.1} parent=1 // pred_fallthru
      _
    // Predicated region
    $region34: #{_forward_jit.1} parent=1 // pred_check
      _
    $region35: #{_forward_jit.1} parent=1 // pred_check_branch
      %62 = sbr.rel (0) target = $region37
    $region36: #{_forward_jit.1} parent=1 // pred_region
      %63 = dma.done [#allocation5], 8192
    $region37: #{_forward_jit.1} parent=1 // pred_fallthru
      _
    // Predicated region
    $region38: #{_forward_jit.1} parent=1 // pred_check
      _
    $region39: #{_forward_jit.1} parent=1 // pred_check_branch
      %65 = sbr.rel (0) target = $region41
    $region40: #{_forward_jit.1} parent=1 // pred_region
      %66 = dma.done [#allocation5], 2048
    $region41: #{_forward_jit.1} parent=1 // pred_fallthru
      _
    %v68 = vld [vmem:[%s0] sm:$0xff]
    %v69 = vld [vmem:[%s0 + $0x8] sm:$0xff]
    %v70 = vpack.c.bf16 %v69, %v68
    %v71 = vld [vmem:[#allocation2] sm:$0xff]
    %v72 = vld [vmem:[#allocation2 + $0x8] sm:$0xff]
    %v73 = vld [vmem:[#allocation2 + $0x10] sm:$0xff]
    %v74 = vld [vmem:[#allocation2 + $0x18] sm:$0xff]
    %v75 = vld [vmem:[#allocation2 + $0x20] sm:$0xff]
    %v76 = vld [vmem:[#allocation2 + $0x28] sm:$0xff]
    %v77 = vld [vmem:[#allocation2 + $0x30] sm:$0xff]
    %v78 = vld [vmem:[#allocation2 + $0x38] sm:$0xff]
    %v79 = vld [vmem:[#allocation2 + $0x40] sm:$0xff]
    %v80 = vld [vmem:[#allocation2 + $0x48] sm:$0xff]
    %v81 = vld [vmem:[#allocation2 + $0x50] sm:$0xff]
    %v82 = vld [vmem:[#allocation2 + $0x58] sm:$0xff]
    %v83 = vld [vmem:[#allocation2 + $0x60] sm:$0xff]
    %v84 = vld [vmem:[#allocation2 + $0x68] sm:$0xff]
    %v85 = vld [vmem:[#allocation2 + $0x70] sm:$0xff]
    %v86 = vld [vmem:[#allocation2 + $0x78] sm:$0xff]
    %v87 = vld [vmem:[%s2] sm:$0xf]
    %v89 = vlaneseq
    %v90 = vshrl.u32 %v89, 7
    %v91 = vsub.s32 0, %v90
    %v92 = vrot.slane %v87, %v91
    %v93 = vlaneseq
    %v94 = vshrl.u32 %v93, 7
    %v95 = vsub.s32 1, %v94
    %v96 = vrot.slane %v87, %v95
    %v97 = vlaneseq
    %v98 = vshrl.u32 %v97, 7
    %v99 = vsub.s32 2, %v98
    %v100 = vrot.slane %v87, %v99
    %v101 = vlaneseq
    %v102 = vshrl.u32 %v101, 7
    %v103 = vsub.s32 3, %v102
    %v104 = vrot.slane %v87, %v103
    %v125 = vunpack.c.l.b16 %v71
    %v126 = vunpack.c.h.b16 %v71
    %v127 = vunpack.c.l.b16 %v72
    %v128 = vunpack.c.h.b16 %v72
    %v129 = vunpack.c.l.b16 %v73
    %v130 = vunpack.c.h.b16 %v73
    %v131 = vunpack.c.l.b16 %v74
    %v132 = vunpack.c.h.b16 %v74
    %v133 = vunpack.c.l.b16 %v75
    %v134 = vunpack.c.h.b16 %v75
    %v135 = vunpack.c.l.b16 %v76
    %v136 = vunpack.c.h.b16 %v76
    %v137 = vunpack.c.l.b16 %v77
    %v138 = vunpack.c.h.b16 %v77
    %v139 = vunpack.c.l.b16 %v78
    %v140 = vunpack.c.h.b16 %v78
    %v141 = vunpack.c.l.b16 %v79
    %v142 = vunpack.c.h.b16 %v79
    %v143 = vunpack.c.l.b16 %v80
    %v144 = vunpack.c.h.b16 %v80
    %v145 = vunpack.c.l.b16 %v81
    %v146 = vunpack.c.h.b16 %v81
    %v147 = vunpack.c.l.b16 %v82
    %v148 = vunpack.c.h.b16 %v82
    %v149 = vunpack.c.l.b16 %v83
    %v150 = vunpack.c.h.b16 %v83
    %v151 = vunpack.c.l.b16 %v84
    %v152 = vunpack.c.h.b16 %v84
    %v153 = vunpack.c.l.b16 %v85
    %v154 = vunpack.c.h.b16 %v85
    %v155 = vunpack.c.l.b16 %v86
    %v156 = vunpack.c.h.b16 %v86
    %v157 = vpack.c.b16 %v129, %v125
    %v158 = vpack.c.b16 %v130, %v126
    %v159 = vpack.c.b16 %v131, %v127
    %v160 = vpack.c.b16 %v132, %v128
    %v161 = vpack.c.b16 %v137, %v133
    %v162 = vpack.c.b16 %v138, %v134
    %v163 = vpack.c.b16 %v139, %v135
    %v164 = vpack.c.b16 %v140, %v136
    %v165 = vpack.c.b16 %v145, %v141
    %v166 = vpack.c.b16 %v146, %v142
    %v167 = vpack.c.b16 %v147, %v143
    %v168 = vpack.c.b16 %v148, %v144
    %v169 = vpack.c.b16 %v153, %v149
    %v170 = vpack.c.b16 %v154, %v150
    %v171 = vpack.c.b16 %v155, %v151
    %v172 = vpack.c.b16 %v156, %v152
    %vm189 = vcmask 523264
    %v191 = vsel %vm189, %v70, 0
    %193 = vmatprep.subr.bf16.mxu0 0
    %194 = vmatpush1.bf16.msra.mxu0 0
    %195 = vmatprep.subr.bf16.mxu0 0
    %196 = vmatpush1.bf16.msra.mxu0 0
    %197 = vmatprep.subr.bf16.mxu0 0
    %198 = vmatpush1.bf16.msra.mxu0 0
    %199 = vmatprep.subr.bf16.mxu0 0
    %200 = vmatpush1.bf16.msra.mxu0 0
    %201 = vmatprep.subr.bf16.mxu0 %v170
    %202 = vmatpush1.bf16.msra.mxu0 %v169
    %203 = vmatprep.subr.bf16.mxu0 %v166
    %204 = vmatpush1.bf16.msra.mxu0 %v165
    %205 = vmatprep.subr.bf16.mxu0 %v162
    %206 = vmatpush1.bf16.msra.mxu0 %v161
    %207 = vmatprep.subr.bf16.mxu0 %v158
    %208 = vmatpush1.bf16.msra.mxu0 %v157
    %209 = vmatprep.subr.bf16.mxu0 0
    %210 = vmatpush2.bf16.msra.mxu0 0
    %211 = vmatprep.subr.bf16.mxu0 0
    %212 = vmatpush2.bf16.msra.mxu0 0
    %213 = vmatprep.subr.bf16.mxu0 0
    %214 = vmatpush2.bf16.msra.mxu0 0
    %215 = vmatprep.subr.bf16.mxu0 0
    %216 = vmatpush2.bf16.msra.mxu0 0
    %217 = vmatprep.subr.bf16.mxu0 0
    %218 = vmatpush2.bf16.msra.mxu0 0
    %219 = vmatprep.subr.bf16.mxu0 0
    %220 = vmatpush2.bf16.msra.mxu0 0
    %221 = vmatprep.subr.bf16.mxu0 0
    %222 = vmatpush2.bf16.msra.mxu0 0
    %223 = vmatprep.subr.bf16.mxu0 0
    %224 = vmatpush2.bf16.msra.mxu0 0
    %225 = vmatprep.mubr.bf16.mxu0 0
    %226 = vmatmul.mubr.bf16.gmra.mxu0 %v191
    %v227 = vpop.f32.mrf.mxu0
    %v228 = vadd.f32 %v92, %v227
    %v229 = vpop.f32.mrf.mxu0
    %v230 = vadd.f32 %v96, %v229
    %v231 = vpop.f32.mrf.mxu0
    %v232 = vadd.f32 %v92, %v231
    %v233 = vpop.f32.mrf.mxu0
    %v234 = vadd.f32 %v96, %v233
    %235 = vdwg.mxu0
    %236 = vmatprep.subr.bf16.mxu0 0
    %237 = vmatpush1.bf16.msra.mxu0 0
    %238 = vmatprep.subr.bf16.mxu0 0
    %239 = vmatpush1.bf16.msra.mxu0 0
    %240 = vmatprep.subr.bf16.mxu0 0
    %241 = vmatpush1.bf16.msra.mxu0 0
    %242 = vmatprep.subr.bf16.mxu0 0
    %243 = vmatpush1.bf16.msra.mxu0 0
    %244 = vmatprep.subr.bf16.mxu0 %v172
    %245 = vmatpush1.bf16.msra.mxu0 %v171
    %246 = vmatprep.subr.bf16.mxu0 %v168
    %247 = vmatpush1.bf16.msra.mxu0 %v167
    %248 = vmatprep.subr.bf16.mxu0 %v164
    %249 = vmatpush1.bf16.msra.mxu0 %v163
    %250 = vmatprep.subr.bf16.mxu0 %v160
    %251 = vmatpush1.bf16.msra.mxu0 %v159
    %252 = vmatprep.subr.bf16.mxu0 0
    %253 = vmatpush2.bf16.msra.mxu0 0
    %254 = vmatprep.subr.bf16.mxu0 0
    %255 = vmatpush2.bf16.msra.mxu0 0
    %256 = vmatprep.subr.bf16.mxu0 0
    %257 = vmatpush2.bf16.msra.mxu0 0
    %258 = vmatprep.subr.bf16.mxu0 0
    %259 = vmatpush2.bf16.msra.mxu0 0
    %260 = vmatprep.subr.bf16.mxu0 0
    %261 = vmatpush2.bf16.msra.mxu0 0
    %262 = vmatprep.subr.bf16.mxu0 0
    %263 = vmatpush2.bf16.msra.mxu0 0
    %264 = vmatprep.subr.bf16.mxu0 0
    %265 = vmatpush2.bf16.msra.mxu0 0
    %266 = vmatprep.subr.bf16.mxu0 0
    %267 = vmatpush2.bf16.msra.mxu0 0
    %268 = vmatprep.mubr.bf16.mxu0 0
    %269 = vmatmul.mubr.bf16.gmra.mxu0 %v191
    %v270 = vpop.f32.mrf.mxu0
    %v271 = vadd.f32 %v100, %v270
    %v272 = vpop.f32.mrf.mxu0
    %v273 = vadd.f32 %v104, %v272
    %v274 = vpop.f32.mrf.mxu0
    %v275 = vadd.f32 %v100, %v274
    %v276 = vpop.f32.mrf.mxu0
    %v277 = vadd.f32 %v104, %v276
    %278 = vdwg.mxu0
    %v279 = vmax.f32 %v228, 0.0
    %v280 = vmax.f32 %v230, 0.0
    %v281 = vmax.f32 %v271, 0.0
    %v282 = vmax.f32 %v273, 0.0
    %v283 = vmax.f32 %v232, 0.0
    %v284 = vmax.f32 %v234, 0.0
    %v285 = vmax.f32 %v275, 0.0
    %v286 = vmax.f32 %v277, 0.0
    %v287 = vpack.c.bf16 %v283, %v279
    %v288 = vpack.c.bf16 %v284, %v280
    %v289 = vpack.c.bf16 %v285, %v281
    %v290 = vpack.c.bf16 %v286, %v282
    %v291 = vld [vmem:[#allocation4] sm:$0xff]
    %v292 = vld [vmem:[#allocation4 + $0x8] sm:$0xff]
    %v293 = vld [vmem:[#allocation4 + $0x10] sm:$0xff]
    %v294 = vld [vmem:[#allocation4 + $0x18] sm:$0xff]
    %v295 = vld [vmem:[#allocation4 + $0x20] sm:$0xff]
    %v296 = vld [vmem:[#allocation4 + $0x28] sm:$0xff]
    %v297 = vld [vmem:[#allocation4 + $0x30] sm:$0xff]
    %v298 = vld [vmem:[#allocation4 + $0x38] sm:$0xff]
    %v299 = vld [vmem:[#allocation4 + $0x40] sm:$0xff]
    %v300 = vld [vmem:[#allocation4 + $0x48] sm:$0xff]
    %v301 = vld [vmem:[#allocation4 + $0x50] sm:$0xff]
    %v302 = vld [vmem:[#allocation4 + $0x58] sm:$0xff]
    %v303 = vld [vmem:[#allocation4 + $0x60] sm:$0xff]
    %v304 = vld [vmem:[#allocation4 + $0x68] sm:$0xff]
    %v305 = vld [vmem:[#allocation4 + $0x70] sm:$0xff]
    %v306 = vld [vmem:[#allocation4 + $0x78] sm:$0xff]
    %v307 = vld [vmem:[#allocation4 + $0x80] sm:$0xff]
    %v308 = vld [vmem:[#allocation4 + $0x88] sm:$0xff]
    %v309 = vld [vmem:[#allocation4 + $0x90] sm:$0xff]
    %v310 = vld [vmem:[#allocation4 + $0x98] sm:$0xff]
    %v311 = vld [vmem:[#allocation4 + $0xa0] sm:$0xff]
    %v312 = vld [vmem:[#allocation4 + $0xa8] sm:$0xff]
    %v313 = vld [vmem:[#allocation4 + $0xb0] sm:$0xff]
    %v314 = vld [vmem:[#allocation4 + $0xb8] sm:$0xff]
    %v315 = vld [vmem:[#allocation4 + $0xc0] sm:$0xff]
    %v316 = vld [vmem:[#allocation4 + $0xc8] sm:$0xff]
    %v317 = vld [vmem:[#allocation4 + $0xd0] sm:$0xff]
    %v318 = vld [vmem:[#allocation4 + $0xd8] sm:$0xff]
    %v319 = vld [vmem:[#allocation4 + $0xe0] sm:$0xff]
    %v320 = vld [vmem:[#allocation4 + $0xe8] sm:$0xff]
    %v321 = vld [vmem:[#allocation4 + $0xf0] sm:$0xff]
    %v322 = vld [vmem:[#allocation4 + $0xf8] sm:$0xff]
    %v323 = vld [vmem:[#allocation4 + $0x100] sm:$0xff]
    %v324 = vld [vmem:[#allocation4 + $0x108] sm:$0xff]
    %v325 = vld [vmem:[#allocation4 + $0x110] sm:$0xff]
    %v326 = vld [vmem:[#allocation4 + $0x118] sm:$0xff]
    %v327 = vld [vmem:[#allocation4 + $0x120] sm:$0xff]
    %v328 = vld [vmem:[#allocation4 + $0x128] sm:$0xff]
    %v329 = vld [vmem:[#allocation4 + $0x130] sm:$0xff]
    %v330 = vld [vmem:[#allocation4 + $0x138] sm:$0xff]
    %v331 = vld [vmem:[#allocation4 + $0x140] sm:$0xff]
    %v332 = vld [vmem:[#allocation4 + $0x148] sm:$0xff]
    %v333 = vld [vmem:[#allocation4 + $0x150] sm:$0xff]
    %v334 = vld [vmem:[#allocation4 + $0x158] sm:$0xff]
    %v335 = vld [vmem:[#allocation4 + $0x160] sm:$0xff]
    %v336 = vld [vmem:[#allocation4 + $0x168] sm:$0xff]
    %v337 = vld [vmem:[#allocation4 + $0x170] sm:$0xff]
    %v338 = vld [vmem:[#allocation4 + $0x178] sm:$0xff]
    %v339 = vld [vmem:[#allocation4 + $0x180] sm:$0xff]
    %v340 = vld [vmem:[#allocation4 + $0x188] sm:$0xff]
    %v341 = vld [vmem:[#allocation4 + $0x190] sm:$0xff]
    %v342 = vld [vmem:[#allocation4 + $0x198] sm:$0xff]
    %v343 = vld [vmem:[#allocation4 + $0x1a0] sm:$0xff]
    %v344 = vld [vmem:[#allocation4 + $0x1a8] sm:$0xff]
    %v345 = vld [vmem:[#allocation4 + $0x1b0] sm:$0xff]
    %v346 = vld [vmem:[#allocation4 + $0x1b8] sm:$0xff]
    %v347 = vld [vmem:[#allocation4 + $0x1c0] sm:$0xff]
    %v348 = vld [vmem:[#allocation4 + $0x1c8] sm:$0xff]
    %v349 = vld [vmem:[#allocation4 + $0x1d0] sm:$0xff]
    %v350 = vld [vmem:[#allocation4 + $0x1d8] sm:$0xff]
    %v351 = vld [vmem:[#allocation4 + $0x1e0] sm:$0xff]
    %v352 = vld [vmem:[#allocation4 + $0x1e8] sm:$0xff]
    %v353 = vld [vmem:[#allocation4 + $0x1f0] sm:$0xff]
    %v354 = vld [vmem:[#allocation4 + $0x1f8] sm:$0xff]
    %v355 = vld [vmem:[%s4] sm:$0x3]
    %v357 = vlaneseq
    %v358 = vshrl.u32 %v357, 7
    %v359 = vsub.s32 0, %v358
    %v360 = vrot.slane %v355, %v359
    %v361 = vlaneseq
    %v362 = vshrl.u32 %v361, 7
    %v363 = vsub.s32 1, %v362
    %v364 = vrot.slane %v355, %v363
    %v431 = vunpack.c.l.b16 %v291
    %v432 = vunpack.c.h.b16 %v291
    %v433 = vunpack.c.l.b16 %v292
    %v434 = vunpack.c.h.b16 %v292
    %v435 = vunpack.c.l.b16 %v293
    %v436 = vunpack.c.h.b16 %v293
    %v437 = vunpack.c.l.b16 %v294
    %v438 = vunpack.c.h.b16 %v294
    %v439 = vunpack.c.l.b16 %v295
    %v440 = vunpack.c.h.b16 %v295
    %v441 = vunpack.c.l.b16 %v296
    %v442 = vunpack.c.h.b16 %v296
    %v443 = vunpack.c.l.b16 %v297
    %v444 = vunpack.c.h.b16 %v297
    %v445 = vunpack.c.l.b16 %v298
    %v446 = vunpack.c.h.b16 %v298
    %v447 = vunpack.c.l.b16 %v299
    %v448 = vunpack.c.h.b16 %v299
    %v449 = vunpack.c.l.b16 %v300
    %v450 = vunpack.c.h.b16 %v300
    %v451 = vunpack.c.l.b16 %v301
    %v452 = vunpack.c.h.b16 %v301
    %v453 = vunpack.c.l.b16 %v302
    %v454 = vunpack.c.h.b16 %v302
    %v455 = vunpack.c.l.b16 %v303
    %v456 = vunpack.c.h.b16 %v303
    %v457 = vunpack.c.l.b16 %v304
    %v458 = vunpack.c.h.b16 %v304
    %v459 = vunpack.c.l.b16 %v305
    %v460 = vunpack.c.h.b16 %v305
    %v461 = vunpack.c.l.b16 %v306
    %v462 = vunpack.c.h.b16 %v306
    %v463 = vunpack.c.l.b16 %v307
    %v464 = vunpack.c.h.b16 %v307
    %v465 = vunpack.c.l.b16 %v308
    %v466 = vunpack.c.h.b16 %v308
    %v467 = vunpack.c.l.b16 %v309
    %v468 = vunpack.c.h.b16 %v309
    %v469 = vunpack.c.l.b16 %v310
    %v470 = vunpack.c.h.b16 %v310
    %v471 = vunpack.c.l.b16 %v311
    %v472 = vunpack.c.h.b16 %v311
    %v473 = vunpack.c.l.b16 %v312
    %v474 = vunpack.c.h.b16 %v312
    %v475 = vunpack.c.l.b16 %v313
    %v476 = vunpack.c.h.b16 %v313
    %v477 = vunpack.c.l.b16 %v314
    %v478 = vunpack.c.h.b16 %v314
    %v479 = vunpack.c.l.b16 %v315
    %v480 = vunpack.c.h.b16 %v315
    %v481 = vunpack.c.l.b16 %v316
    %v482 = vunpack.c.h.b16 %v316
    %v483 = vunpack.c.l.b16 %v317
    %v484 = vunpack.c.h.b16 %v317
    %v485 = vunpack.c.l.b16 %v318
    %v486 = vunpack.c.h.b16 %v318
    %v487 = vunpack.c.l.b16 %v319
    %v488 = vunpack.c.h.b16 %v319
    %v489 = vunpack.c.l.b16 %v320
    %v490 = vunpack.c.h.b16 %v320
    %v491 = vunpack.c.l.b16 %v321
    %v492 = vunpack.c.h.b16 %v321
    %v493 = vunpack.c.l.b16 %v322
    %v494 = vunpack.c.h.b16 %v322
    %v495 = vunpack.c.l.b16 %v323
    %v496 = vunpack.c.h.b16 %v323
    %v497 = vunpack.c.l.b16 %v324
    %v498 = vunpack.c.h.b16 %v324
    %v499 = vunpack.c.l.b16 %v325
    %v500 = vunpack.c.h.b16 %v325
    %v501 = vunpack.c.l.b16 %v326
    %v502 = vunpack.c.h.b16 %v326
    %v503 = vunpack.c.l.b16 %v327
    %v504 = vunpack.c.h.b16 %v327
    %v505 = vunpack.c.l.b16 %v328
    %v506 = vunpack.c.h.b16 %v328
    %v507 = vunpack.c.l.b16 %v329
    %v508 = vunpack.c.h.b16 %v329
    %v509 = vunpack.c.l.b16 %v330
    %v510 = vunpack.c.h.b16 %v330
    %v511 = vunpack.c.l.b16 %v331
    %v512 = vunpack.c.h.b16 %v331
    %v513 = vunpack.c.l.b16 %v332
    %v514 = vunpack.c.h.b16 %v332
    %v515 = vunpack.c.l.b16 %v333
    %v516 = vunpack.c.h.b16 %v333
    %v517 = vunpack.c.l.b16 %v334
    %v518 = vunpack.c.h.b16 %v334
    %v519 = vunpack.c.l.b16 %v335
    %v520 = vunpack.c.h.b16 %v335
    %v521 = vunpack.c.l.b16 %v336
    %v522 = vunpack.c.h.b16 %v336
    %v523 = vunpack.c.l.b16 %v337
    %v524 = vunpack.c.h.b16 %v337
    %v525 = vunpack.c.l.b16 %v338
    %v526 = vunpack.c.h.b16 %v338
    %v527 = vunpack.c.l.b16 %v339
    %v528 = vunpack.c.h.b16 %v339
    %v529 = vunpack.c.l.b16 %v340
    %v530 = vunpack.c.h.b16 %v340
    %v531 = vunpack.c.l.b16 %v341
    %v532 = vunpack.c.h.b16 %v341
    %v533 = vunpack.c.l.b16 %v342
    %v534 = vunpack.c.h.b16 %v342
    %v535 = vunpack.c.l.b16 %v343
    %v536 = vunpack.c.h.b16 %v343
    %v537 = vunpack.c.l.b16 %v344
    %v538 = vunpack.c.h.b16 %v344
    %v539 = vunpack.c.l.b16 %v345
    %v540 = vunpack.c.h.b16 %v345
    %v541 = vunpack.c.l.b16 %v346
    %v542 = vunpack.c.h.b16 %v346
    %v543 = vunpack.c.l.b16 %v347
    %v544 = vunpack.c.h.b16 %v347
    %v545 = vunpack.c.l.b16 %v348
    %v546 = vunpack.c.h.b16 %v348
    %v547 = vunpack.c.l.b16 %v349
    %v548 = vunpack.c.h.b16 %v349
    %v549 = vunpack.c.l.b16 %v350
    %v550 = vunpack.c.h.b16 %v350
    %v551 = vunpack.c.l.b16 %v351
    %v552 = vunpack.c.h.b16 %v351
    %v553 = vunpack.c.l.b16 %v352
    %v554 = vunpack.c.h.b16 %v352
    %v555 = vunpack.c.l.b16 %v353
    %v556 = vunpack.c.h.b16 %v353
    %v557 = vunpack.c.l.b16 %v354
    %v558 = vunpack.c.h.b16 %v354
    %v559 = vpack.c.b16 %v433, %v431
    %v560 = vpack.c.b16 %v434, %v432
    %v561 = vpack.c.b16 %v437, %v435
    %v562 = vpack.c.b16 %v438, %v436
    %v563 = vpack.c.b16 %v441, %v439
    %v564 = vpack.c.b16 %v442, %v440
    %v565 = vpack.c.b16 %v445, %v443
    %v566 = vpack.c.b16 %v446, %v444
    %v567 = vpack.c.b16 %v449, %v447
    %v568 = vpack.c.b16 %v450, %v448
    %v569 = vpack.c.b16 %v453, %v451
    %v570 = vpack.c.b16 %v454, %v452
    %v571 = vpack.c.b16 %v457, %v455
    %v572 = vpack.c.b16 %v458, %v456
    %v573 = vpack.c.b16 %v461, %v459
    %v574 = vpack.c.b16 %v462, %v460
    %v575 = vpack.c.b16 %v465, %v463
    %v576 = vpack.c.b16 %v466, %v464
    %v577 = vpack.c.b16 %v469, %v467
    %v578 = vpack.c.b16 %v470, %v468
    %v579 = vpack.c.b16 %v473, %v471
    %v580 = vpack.c.b16 %v474, %v472
    %v581 = vpack.c.b16 %v477, %v475
    %v582 = vpack.c.b16 %v478, %v476
    %v583 = vpack.c.b16 %v481, %v479
    %v584 = vpack.c.b16 %v482, %v480
    %v585 = vpack.c.b16 %v485, %v483
    %v586 = vpack.c.b16 %v486, %v484
    %v587 = vpack.c.b16 %v489, %v487
    %v588 = vpack.c.b16 %v490, %v488
    %v589 = vpack.c.b16 %v493, %v491
    %v590 = vpack.c.b16 %v494, %v492
    %v591 = vpack.c.b16 %v497, %v495
    %v592 = vpack.c.b16 %v498, %v496
    %v593 = vpack.c.b16 %v501, %v499
    %v594 = vpack.c.b16 %v502, %v500
    %v595 = vpack.c.b16 %v505, %v503
    %v596 = vpack.c.b16 %v506, %v504
    %v597 = vpack.c.b16 %v509, %v507
    %v598 = vpack.c.b16 %v510, %v508
    %v599 = vpack.c.b16 %v513, %v511
    %v600 = vpack.c.b16 %v514, %v512
    %v601 = vpack.c.b16 %v517, %v515
    %v602 = vpack.c.b16 %v518, %v516
    %v603 = vpack.c.b16 %v521, %v519
    %v604 = vpack.c.b16 %v522, %v520
    %v605 = vpack.c.b16 %v525, %v523
    %v606 = vpack.c.b16 %v526, %v524
    %v607 = vpack.c.b16 %v529, %v527
    %v608 = vpack.c.b16 %v530, %v528
    %v609 = vpack.c.b16 %v533, %v531
    %v610 = vpack.c.b16 %v534, %v532
    %v611 = vpack.c.b16 %v537, %v535
    %v612 = vpack.c.b16 %v538, %v536
    %v613 = vpack.c.b16 %v541, %v539
    %v614 = vpack.c.b16 %v542, %v540
    %v615 = vpack.c.b16 %v545, %v543
    %v616 = vpack.c.b16 %v546, %v544
    %v617 = vpack.c.b16 %v549, %v547
    %v618 = vpack.c.b16 %v550, %v548
    %v619 = vpack.c.b16 %v553, %v551
    %v620 = vpack.c.b16 %v554, %v552
    %v621 = vpack.c.b16 %v557, %v555
    %v622 = vpack.c.b16 %v558, %v556
    %687 = vmatprep.subr.bf16.mxu0 %v574
    %688 = vmatpush1.bf16.msra.mxu0 %v573
    %689 = vmatprep.subr.bf16.mxu0 %v572
    %690 = vmatpush1.bf16.msra.mxu0 %v571
    %691 = vmatprep.subr.bf16.mxu0 %v570
    %692 = vmatpush1.bf16.msra.mxu0 %v569
    %693 = vmatprep.subr.bf16.mxu0 %v568
    %694 = vmatpush1.bf16.msra.mxu0 %v567
    %695 = vmatprep.subr.bf16.mxu0 %v566
    %696 = vmatpush1.bf16.msra.mxu0 %v565
    %697 = vmatprep.subr.bf16.mxu0 %v564
    %698 = vmatpush1.bf16.msra.mxu0 %v563
    %699 = vmatprep.subr.bf16.mxu0 %v562
    %700 = vmatpush1.bf16.msra.mxu0 %v561
    %701 = vmatprep.subr.bf16.mxu0 %v560
    %702 = vmatpush1.bf16.msra.mxu0 %v559
    %703 = vmatprep.subr.bf16.mxu0 %v590
    %704 = vmatpush2.bf16.msra.mxu0 %v589
    %705 = vmatprep.subr.bf16.mxu0 %v588
    %706 = vmatpush2.bf16.msra.mxu0 %v587
    %707 = vmatprep.subr.bf16.mxu0 %v586
    %708 = vmatpush2.bf16.msra.mxu0 %v585
    %709 = vmatprep.subr.bf16.mxu0 %v584
    %710 = vmatpush2.bf16.msra.mxu0 %v583
    %711 = vmatprep.subr.bf16.mxu0 %v582
    %712 = vmatpush2.bf16.msra.mxu0 %v581
    %713 = vmatprep.subr.bf16.mxu0 %v580
    %714 = vmatpush2.bf16.msra.mxu0 %v579
    %715 = vmatprep.subr.bf16.mxu0 %v578
    %716 = vmatpush2.bf16.msra.mxu0 %v577
    %717 = vmatprep.subr.bf16.mxu0 %v576
    %718 = vmatpush2.bf16.msra.mxu0 %v575
    %719 = vmatprep.mubr.bf16.mxu0 %v288
    %720 = vmatmul.mubr.bf16.gmra.mxu0 %v287
    %v721 = vpop.f32.mrf.mxu0
    %v722 = vadd.f32 %v360, %v721
    %v723 = vpop.f32.mrf.mxu0
    %v724 = vadd.f32 %v364, %v723
    %v725 = vpop.f32.mrf.mxu0
    %v726 = vadd.f32 %v360, %v725
    %v727 = vpop.f32.mrf.mxu0
    %v728 = vadd.f32 %v364, %v727
    %729 = vdwg.mxu0
    %730 = vmatprep.subr.bf16.mxu0 %v606
    %731 = vmatpush1.bf16.msra.mxu0 %v605
    %732 = vmatprep.subr.bf16.mxu0 %v604
    %733 = vmatpush1.bf16.msra.mxu0 %v603
    %734 = vmatprep.subr.bf16.mxu0 %v602
    %735 = vmatpush1.bf16.msra.mxu0 %v601
    %736 = vmatprep.subr.bf16.mxu0 %v600
    %737 = vmatpush1.bf16.msra.mxu0 %v599
    %738 = vmatprep.subr.bf16.mxu0 %v598
    %739 = vmatpush1.bf16.msra.mxu0 %v597
    %740 = vmatprep.subr.bf16.mxu0 %v596
    %741 = vmatpush1.bf16.msra.mxu0 %v595
    %742 = vmatprep.subr.bf16.mxu0 %v594
    %743 = vmatpush1.bf16.msra.mxu0 %v593
    %744 = vmatprep.subr.bf16.mxu0 %v592
    %745 = vmatpush1.bf16.msra.mxu0 %v591
    %746 = vmatprep.subr.bf16.mxu0 %v622
    %747 = vmatpush2.bf16.msra.mxu0 %v621
    %748 = vmatprep.subr.bf16.mxu0 %v620
    %749 = vmatpush2.bf16.msra.mxu0 %v619
    %750 = vmatprep.subr.bf16.mxu0 %v618
    %751 = vmatpush2.bf16.msra.mxu0 %v617
    %752 = vmatprep.subr.bf16.mxu0 %v616
    %753 = vmatpush2.bf16.msra.mxu0 %v615
    %754 = vmatprep.subr.bf16.mxu0 %v614
    %755 = vmatpush2.bf16.msra.mxu0 %v613
    %756 = vmatprep.subr.bf16.mxu0 %v612
    %757 = vmatpush2.bf16.msra.mxu0 %v611
    %758 = vmatprep.subr.bf16.mxu0 %v610
    %759 = vmatpush2.bf16.msra.mxu0 %v609
    %760 = vmatprep.subr.bf16.mxu0 %v608
    %761 = vmatpush2.bf16.msra.mxu0 %v607
    %762 = vmatprep.mubr.bf16.mxu0 %v290
    %763 = vmatmul.mubr.bf16.gmra.mxu0 %v289
    %v764 = vpop.f32.mrf.mxu0
    %v765 = vadd.f32 %v722, %v764
    %v766 = vpop.f32.mrf.mxu0
    %v767 = vadd.f32 %v724, %v766
    %v768 = vpop.f32.mrf.mxu0
    %v769 = vadd.f32 %v726, %v768
    %v770 = vpop.f32.mrf.mxu0
    %v771 = vadd.f32 %v728, %v770
    %772 = vdwg.mxu0
    %v773 = vmax.f32 %v765, 0.0
    %v774 = vmax.f32 %v767, 0.0
    %v775 = vmax.f32 %v769, 0.0
    %v776 = vmax.f32 %v771, 0.0
    %v777 = vpack.c.bf16 %v775, %v773
    %v778 = vpack.c.bf16 %v776, %v774
    %v779 = vld [vmem:[#allocation6] sm:$0xf]
    %v780 = vld [vmem:[#allocation6 + $0x4] sm:$0xf]
    %v781 = vld [vmem:[#allocation6 + $0x8] sm:$0xf]
    %v782 = vld [vmem:[#allocation6 + $0xc] sm:$0xf]
    %v783 = vld [vmem:[#allocation6 + $0x10] sm:$0xf]
    %v784 = vld [vmem:[#allocation6 + $0x14] sm:$0xf]
    %v785 = vld [vmem:[#allocation6 + $0x18] sm:$0xf]
    %v786 = vld [vmem:[#allocation6 + $0x1c] sm:$0xf]
    %v787 = vld [vmem:[#allocation6 + $0x20] sm:$0xf]
    %v788 = vld [vmem:[#allocation6 + $0x24] sm:$0xf]
    %v789 = vld [vmem:[#allocation6 + $0x28] sm:$0xf]
    %v790 = vld [vmem:[#allocation6 + $0x2c] sm:$0xf]
    %v791 = vld [vmem:[#allocation6 + $0x30] sm:$0xf]
    %v792 = vld [vmem:[#allocation6 + $0x34] sm:$0xf]
    %v793 = vld [vmem:[#allocation6 + $0x38] sm:$0xf]
    %v794 = vld [vmem:[#allocation6 + $0x3c] sm:$0xf]
    %v795 = vld [vmem:[#allocation6 + $0x40] sm:$0xf]
    %v796 = vld [vmem:[#allocation6 + $0x44] sm:$0xf]
    %v797 = vld [vmem:[#allocation6 + $0x48] sm:$0xf]
    %v798 = vld [vmem:[#allocation6 + $0x4c] sm:$0xf]
    %v799 = vld [vmem:[#allocation6 + $0x50] sm:$0xf]
    %v800 = vld [vmem:[#allocation6 + $0x54] sm:$0xf]
    %v801 = vld [vmem:[#allocation6 + $0x58] sm:$0xf]
    %v802 = vld [vmem:[#allocation6 + $0x5c] sm:$0xf]
    %v803 = vld [vmem:[#allocation6 + $0x60] sm:$0xf]
    %v804 = vld [vmem:[#allocation6 + $0x64] sm:$0xf]
    %v805 = vld [vmem:[#allocation6 + $0x68] sm:$0xf]
    %v806 = vld [vmem:[#allocation6 + $0x6c] sm:$0xf]
    %v807 = vld [vmem:[#allocation6 + $0x70] sm:$0xf]
    %v808 = vld [vmem:[#allocation6 + $0x74] sm:$0xf]
    %v809 = vld [vmem:[#allocation6 + $0x78] sm:$0xf]
    %v810 = vld [vmem:[#allocation6 + $0x7c] sm:$0xf]
    %v811 = vld [vmem:[%s6] sm:$0x1]
    %v813 = vlaneseq
    %v814 = vshrl.u32 %v813, 7
    %v815 = vsub.s32 0, %v814
    %v816 = vrot.slane %v811, %v815
    %v850 = vunpack.c.l.b16 %v779
    %v851 = vunpack.c.l.b16 %v780
    %v852 = vunpack.c.l.b16 %v781
    %v853 = vunpack.c.l.b16 %v782
    %v854 = vunpack.c.l.b16 %v783
    %v855 = vunpack.c.l.b16 %v784
    %v856 = vunpack.c.l.b16 %v785
    %v857 = vunpack.c.l.b16 %v786
    %v858 = vunpack.c.l.b16 %v787
    %v859 = vunpack.c.l.b16 %v788
    %v860 = vunpack.c.l.b16 %v789
    %v861 = vunpack.c.l.b16 %v790
    %v862 = vunpack.c.l.b16 %v791
    %v863 = vunpack.c.l.b16 %v792
    %v864 = vunpack.c.l.b16 %v793
    %v865 = vunpack.c.l.b16 %v794
    %v866 = vunpack.c.l.b16 %v795
    %v867 = vunpack.c.l.b16 %v796
    %v868 = vunpack.c.l.b16 %v797
    %v869 = vunpack.c.l.b16 %v798
    %v870 = vunpack.c.l.b16 %v799
    %v871 = vunpack.c.l.b16 %v800
    %v872 = vunpack.c.l.b16 %v801
    %v873 = vunpack.c.l.b16 %v802
    %v874 = vunpack.c.l.b16 %v803
    %v875 = vunpack.c.l.b16 %v804
    %v876 = vunpack.c.l.b16 %v805
    %v877 = vunpack.c.l.b16 %v806
    %v878 = vunpack.c.l.b16 %v807
    %v879 = vunpack.c.l.b16 %v808
    %v880 = vunpack.c.l.b16 %v809
    %v881 = vunpack.c.l.b16 %v810
    %v882 = vpack.c.b16 %v851, %v850
    %v883 = vpack.c.b16 %v853, %v852
    %v884 = vpack.c.b16 %v855, %v854
    %v885 = vpack.c.b16 %v857, %v856
    %v886 = vpack.c.b16 %v859, %v858
    %v887 = vpack.c.b16 %v861, %v860
    %v888 = vpack.c.b16 %v863, %v862
    %v889 = vpack.c.b16 %v865, %v864
    %v890 = vpack.c.b16 %v867, %v866
    %v891 = vpack.c.b16 %v869, %v868
    %v892 = vpack.c.b16 %v871, %v870
    %v893 = vpack.c.b16 %v873, %v872
    %v894 = vpack.c.b16 %v875, %v874
    %v895 = vpack.c.b16 %v877, %v876
    %v896 = vpack.c.b16 %v879, %v878
    %v897 = vpack.c.b16 %v881, %v880
    %914 = vmatprep.subr.bf16.mxu0 0
    %915 = vmatpush1.bf16.msra.mxu0 %v889
    %916 = vmatprep.subr.bf16.mxu0 0
    %917 = vmatpush1.bf16.msra.mxu0 %v888
    %918 = vmatprep.subr.bf16.mxu0 0
    %919 = vmatpush1.bf16.msra.mxu0 %v887
    %920 = vmatprep.subr.bf16.mxu0 0
    %921 = vmatpush1.bf16.msra.mxu0 %v886
    %922 = vmatprep.subr.bf16.mxu0 0
    %923 = vmatpush1.bf16.msra.mxu0 %v885
    %924 = vmatprep.subr.bf16.mxu0 0
    %925 = vmatpush1.bf16.msra.mxu0 %v884
    %926 = vmatprep.subr.bf16.mxu0 0
    %927 = vmatpush1.bf16.msra.mxu0 %v883
    %928 = vmatprep.subr.bf16.mxu0 0
    %929 = vmatpush1.bf16.msra.mxu0 %v882
    %930 = vmatprep.subr.bf16.mxu0 0
    %931 = vmatpush2.bf16.msra.mxu0 %v897
    %932 = vmatprep.subr.bf16.mxu0 0
    %933 = vmatpush2.bf16.msra.mxu0 %v896
    %934 = vmatprep.subr.bf16.mxu0 0
    %935 = vmatpush2.bf16.msra.mxu0 %v895
    %936 = vmatprep.subr.bf16.mxu0 0
    %937 = vmatpush2.bf16.msra.mxu0 %v894
    %938 = vmatprep.subr.bf16.mxu0 0
    %939 = vmatpush2.bf16.msra.mxu0 %v893
    %940 = vmatprep.subr.bf16.mxu0 0
    %941 = vmatpush2.bf16.msra.mxu0 %v892
    %942 = vmatprep.subr.bf16.mxu0 0
    %943 = vmatpush2.bf16.msra.mxu0 %v891
    %944 = vmatprep.subr.bf16.mxu0 0
    %945 = vmatpush2.bf16.msra.mxu0 %v890
    %946 = vmatprep.mubr.bf16.mxu0 %v778
    %947 = vmatmul.mubr.bf16.gmra.mxu0 %v777
    %v948 = vpop.f32.mrf.mxu0
    %v949 = vadd.f32 %v816, %v948
    %v950 = vpop.f32.mrf.mxu0
    %v951 = vpop.f32.mrf.mxu0
    %v952 = vadd.f32 %v816, %v951
    %v953 = vpop.f32.mrf.mxu0
    %954 = vdwg.mxu0
    %955 = vst [vmem:[%s7] sm:$0xff] %v949
    %956 = vst [vmem:[%s7 + $0x8] sm:$0xff] %v952
    // Predicated region
    $region42: #{_forward_jit.1} parent=1 // pred_check
      _
    $region43: #{_forward_jit.1} parent=1 // pred_check_branch
      %958 = sbr.rel (0) target = $region45
    $region44: #{_forward_jit.1} parent=1 // pred_region
      _
    $region45: #{_forward_jit.1} parent=1 // pred_fallthru
      _
    // Predicated region
    $region46: #{_forward_jit.1} parent=1 // pred_check
      _
    $region47: #{_forward_jit.1} parent=1 // pred_check_branch
      %960 = sbr.rel (0) target = $region49
    $region48: #{_forward_jit.1} parent=1 // pred_region
      _
    $region49: #{_forward_jit.1} parent=1 // pred_fallthru
      _
    %961 = vsyncpa [#allocation3], 1
    %962 = vsyncpa [#allocation5], 1

</llo_original>
